<compile_context>
chip_gen: v7x
topology: tpu7x:2x2x1
jax: 0.10.0
libtpu: 0.0.40
codegen_flags: <defaults>
</compile_context>

<pallas_src>
import math

import jax
import jax.numpy as jnp
from jax.experimental import pallas as pl
from jax.experimental.pallas import tpu as pltpu


def _eca_kernel_size(num_channels, gamma=2, b=1):
    t = int(abs((math.log(num_channels, 2) + b) / gamma))
    return t if t % 2 else t + 1


def _eca_band_matrix(k1d, c):
    """(C, C) band matrix M with M[co, ci] = k1d[ci - co + pad]; M @ v == conv1d(v)."""
    k = int(k1d.shape[0])
    pad = (k - 1) // 2
    co = jnp.arange(c)[:, None]
    ci = jnp.arange(c)[None, :]
    tap = ci - co + pad
    valid = (tap >= 0) & (tap < k)
    return jnp.where(valid, k1d[jnp.clip(tap, 0, k - 1)], 0.0).astype(jnp.float32)


def _conv7x7_rhs_matrix(w2d, h, w):
    """(HW, HW) matrix M with comp_flat @ M == flatten(conv2d(comp_2d, w2d, pad=3)).

    M[m, n] = w2d[i_m - i_n + 3, j_m - j_n + 3] when both tap offsets are in range,
    else 0 (zero padding is baked in).
    """
    hw = h * w
    idx = jnp.arange(hw)
    ii = idx // w
    jj = idx % w
    di = ii[:, None] - ii[None, :]          # i_m - i_n
    dj = jj[:, None] - jj[None, :]          # j_m - j_n
    valid = (jnp.abs(di) <= 3) & (jnp.abs(dj) <= 3)
    taps = w2d[jnp.clip(di + 3, 0, 6), jnp.clip(dj + 3, 0, 6)]
    return jnp.where(valid, taps, 0.0).astype(jnp.float32)


def _attention_block_kernel(x_ref, band_t_ref, w_ref, b_ref,
                            m_max_ref, m_mean_ref, bn_ref, out_ref, out1_ref):
    """Fused channel attention + 1x1 combine + spatial attention for one batch tile."""
    bt = x_ref.shape[0]
    x = x_ref[...]                                            # (bt, C, HW)

    # --- channel attention (ECA) -------------------------------------------------
    # Global avg + max pool over the spatial (lane) axis.  The ECA Conv1d is linear
    # and bias-free, so conv(avg) + conv(max) == conv(avg + max).
    pooled = jnp.mean(x, axis=-1) + jnp.max(x, axis=-1)       # (bt, C)
    logits = jnp.dot(pooled, band_t_ref[...],
                     preferred_element_type=jnp.float32)      # (bt, C): ECA conv1d
    gate_c = jax.nn.sigmoid(logits)                           # (bt, C)
    x_g = x * gate_c[:, :, None]                              # VPU broadcast multiply

    # --- 1x1 "combine" conv: shared (C/2, C) weights, one 2-D MXU matmul / batch --
    w = w_ref[...]                                            # (C/2, C)
    bias = b_ref[...]                                         # (C/2, 1)
    for i in range(bt):                                       # bt: small static constant
        out1_ref[i] = jnp.dot(w, x_g[i],
                              preferred_element_type=jnp.float32) + bias
    out1 = out1_ref[...]                                      # (bt, C/2, HW)

    # --- spatial attention: ChannelPool + 7x7 conv + BatchNorm + sigmoid gate -----
    cmax = jnp.max(out1, axis=1)                              # (bt, HW)
    cmean = jnp.mean(out1, axis=1)                            # (bt, HW)
    smap = (jnp.dot(cmax, m_max_ref[...], preferred_element_type=jnp.float32)
            + jnp.dot(cmean, m_mean_ref[...], preferred_element_type=jnp.float32))
    gate_s = jax.nn.sigmoid(smap * bn_ref[0] + bn_ref[1])     # eval-mode BN folded
    out_ref[...] = (out1 * gate_s[:, None, :]).astype(out_ref.dtype)


def _pick_batch_tile(b, c, o, hw):
    """Chip-aware batch tile size and VMEM limit for the fused kernel."""
    per_elem = (c + o) * hw * 4                 # pipelined block bytes per batch element
    vmem_cap = 128 * 1024 * 1024
    try:
        vmem_cap = int(getattr(pltpu.get_tpu_info(), "vmem_capacity_bytes", vmem_cap))
    except Exception:
        pass
    two_cores = vmem_cap <= 64 * 1024 * 1024    # v7x-like: 64 MiB VMEM, 2 TensorCores
    target_block_bytes = (10 if two_cores else 16) * 1024 * 1024
    bt = max(1, min(b, target_block_bytes // per_elem))
    if two_cores and b >= 4:
        bt = min(bt, b // 4)                    # >= 2 pipelined grid steps per TensorCore
    bt = min(bt, 16)                            # bound the static per-batch matmul unroll
    while b % bt:
        bt -= 1
    const_bytes = 2 * hw * hw * 4 + c * c * 4 + (o * c + o) * 4
    need = 2 * bt * per_elem + 2 * const_bytes + bt * o * hw * 4   # dbl-buffered + scratch
    vmem_limit = int(min(max(need + (8 << 20), 32 << 20), 48 << 20))
    return bt, vmem_limit


def attention_block_forward(x, params):
    """x: (B, C, H, W) float32 NCHW.  Returns (B, C//2, H, W)."""
    b, c, h, w = x.shape
    o = c // 2
    hw = h * w
    eps = 1e-5

    # Tiny weight-space constants, precomputed once outside the kernel.
    band_t = _eca_band_matrix(params["eca_w"], c).T                 # (C, C)
    wc = params["combine_w"].reshape(o, c).astype(jnp.float32)      # (C/2, C)
    bc = params["combine_b"].reshape(o, 1).astype(jnp.float32)      # (C/2, 1)
    sw = params["spatial_w"].astype(jnp.float32)                    # (1, 2, 7, 7)
    # TODO(synk): for large H*W replace the dense (HW, HW) conv matrices with 49
    # shifted multiply-adds (pltpu.roll + boundary masks) inside the kernel.
    m_max = _conv7x7_rhs_matrix(sw[0, 0], h, w)                     # (HW, HW)
    m_mean = _conv7x7_rhs_matrix(sw[0, 1], h, w)                    # (HW, HW)
    scale = params["bn_gamma"] / jnp.sqrt(params["bn_rv"] + eps)    # eval-mode BN
    shift = params["bn_beta"] - params["bn_rm"] * scale
    bn_ss = jnp.concatenate([scale, shift]).astype(jnp.float32)     # (2,)

    xf = x.reshape(b, c, hw).astype(jnp.float32)

    bt, vmem_limit = _pick_batch_tile(b, c, o, hw)
    grid = (b // bt,)

    out = pl.pallas_call(
        _attention_block_kernel,
        out_shape=jax.ShapeDtypeStruct((b, o, hw), jnp.float32),
        grid=grid,
        in_specs=[
            pl.BlockSpec((bt, c, hw), lambda i: (i, 0, 0)),     # x, lane-dense HW
            pl.BlockSpec((c, c), lambda i: (0, 0)),             # ECA band matrix (T)
            pl.BlockSpec((o, c), lambda i: (0, 0)),             # combine weight
            pl.BlockSpec((o, 1), lambda i: (0, 0)),             # combine bias
            pl.BlockSpec((hw, hw), lambda i: (0, 0)),           # 7x7 conv matrix (max ch)
            pl.BlockSpec((hw, hw), lambda i: (0, 0)),           # 7x7 conv matrix (mean ch)
            pl.BlockSpec(memory_space=pltpu.MemorySpace.SMEM),  # BN scale/shift scalars
        ],
        out_specs=pl.BlockSpec((bt, o, hw), lambda i: (i, 0, 0)),
        scratch_shapes=[pltpu.VMEM((bt, o, hw), jnp.float32)],
        compiler_params=pltpu.CompilerParams(
            dimension_semantics=("parallel",),
            vmem_limit_bytes=vmem_limit),
    )(xf, band_t, wc, bc, m_max, m_mean, bn_ss)

    return out.reshape(b, o, h, w)


def reference_forward(x, params):
    """Pure-JAX mirror of the PyTorch forward (eval-mode BatchNorm), f32-accurate."""
    b, c, h, w = x.shape
    o = c // 2
    eps = 1e-5
    hi = jax.lax.Precision.HIGHEST
    k1d = params["eca_w"]
    k = int(k1d.shape[0])
    pad = (k - 1) // 2

    def conv1d_channels(v):                      # v: (B, C)
        return jax.lax.conv_general_dilated(
            v[:, None, :], k1d[None, None, :], (1,), ((pad, pad),),
            dimension_numbers=("NCH", "OIH", "NCH"), precision=hi)[:, 0, :]

    mx = jnp.max(x, axis=(2, 3))
    avg = jnp.mean(x, axis=(2, 3))
    att = conv1d_channels(mx) + conv1d_channels(avg)       # pool order: max, then avg
    gate_c = jax.nn.sigmoid(att)[:, :, None, None]
    y = x * gate_c

    wc = params["combine_w"].reshape(o, c)
    out1 = (jnp.einsum("oc,bchw->bohw", wc, y, precision=hi)
            + params["combine_b"].reshape(1, o, 1, 1))

    comp = jnp.concatenate([jnp.max(out1, axis=1, keepdims=True),
                            jnp.mean(out1, axis=1, keepdims=True)], axis=1)
    smap = jax.lax.conv_general_dilated(
        comp, params["spatial_w"], (1, 1), ((3, 3), (3, 3)),
        dimension_numbers=("NCHW", "OIHW", "NCHW"), precision=hi)
    bn = ((smap - params["bn_rm"].reshape(1, 1, 1, 1))
          / jnp.sqrt(params["bn_rv"].reshape(1, 1, 1, 1) + eps)
          * params["bn_gamma"].reshape(1, 1, 1, 1)
          + params["bn_beta"].reshape(1, 1, 1, 1))
    return out1 * jax.nn.sigmoid(bn)


if __name__ == "__main__":
    B, C, H, W = 2, 16, 16, 16
    K = _eca_kernel_size(C)          # = 3 for C=16

    key = jax.random.PRNGKey(0)
    ks = jax.random.split(key, 9)
    params = {
        "eca_w":     0.5 * jax.random.normal(ks[0], (K,), jnp.float32),
        "combine_w": 0.1 * jax.random.normal(ks[1], (C // 2, C, 1, 1), jnp.float32),
        "combine_b": 0.1 * jax.random.normal(ks[2], (C // 2,), jnp.float32),
        "spatial_w": 0.1 * jax.random.normal(ks[3], (1, 2, 7, 7), jnp.float32),
        "bn_gamma":  1.0 + 0.1 * jax.random.normal(ks[4], (1,), jnp.float32),
        "bn_beta":   0.1 * jax.random.normal(ks[5], (1,), jnp.float32),
        "bn_rm":     0.1 * jax.random.normal(ks[6], (1,), jnp.float32),
        "bn_rv":     0.5 + jnp.abs(jax.random.normal(ks[7], (1,), jnp.float32)),
    }
    x = jax.random.normal(ks[8], (B, C, H, W), jnp.float32)

    out = jax.block_until_ready(attention_block_forward(x, params))
    ref = jax.block_until_ready(reference_forward(x, params))

    assert out.shape == (B, C // 2, H, W), out.shape
    max_err = float(jnp.max(jnp.abs(out - ref)))
    assert jnp.allclose(out, ref, rtol=1e-3, atol=2e-3), max_err

    print("KERNEL_OK")
</pallas_src>

<mosaic_0001>
module attributes {stable_mosaic.version = 11 : i64} {
  func.func @_attention_block_kernel(%arg0: i32, %arg1: memref<2x16x256xf32, #tpu.memory_space<vmem>>, %arg2: memref<16x16xf32, #tpu.memory_space<vmem>>, %arg3: memref<8x16xf32, #tpu.memory_space<vmem>>, %arg4: memref<8x1xf32, #tpu.memory_space<vmem>>, %arg5: memref<256x256xf32, #tpu.memory_space<vmem>>, %arg6: memref<256x256xf32, #tpu.memory_space<vmem>>, %arg7: memref<2xf32, #tpu.memory_space<smem>>, %arg8: memref<2x8x256xf32, #tpu.memory_space<vmem>>, %arg9: memref<2x8x256xf32, #tpu.memory_space<vmem>>) attributes {dimension_semantics = [#tpu.dimension_semantics<parallel>], iteration_bounds = array<i64: 1>, scalar_prefetch = 0 : i64, scratch_operands = 1 : i64, tpu.core_type = #tpu.core_type<tc>, window_params = [{transform_indices = @transform_0, window_bounds = array<i64: 2, 16, 256>}, {pipeline_mode = #tpu.pipeline_mode<synchronous>, transform_indices = @transform_1, window_bounds = array<i64: 16, 16>}, {pipeline_mode = #tpu.pipeline_mode<synchronous>, transform_indices = @transform_2, window_bounds = array<i64: 8, 16>}, {pipeline_mode = #tpu.pipeline_mode<synchronous>, transform_indices = @transform_3, window_bounds = array<i64: 8, 1>}, {pipeline_mode = #tpu.pipeline_mode<synchronous>, transform_indices = @transform_4, window_bounds = array<i64: 256, 256>}, {pipeline_mode = #tpu.pipeline_mode<synchronous>, transform_indices = @transform_5, window_bounds = array<i64: 256, 256>}, {transform_indices = @transform_6, window_bounds = array<i64: 2>}, {transform_indices = @transform_7, window_bounds = array<i64: 2, 8, 256>}]} {
    %c0 = arith.constant 0 : index
    %c0_0 = arith.constant 0 : index
    %c0_1 = arith.constant 0 : index
    %0 = vector.load %arg1[%c0, %c0_0, %c0_1] : memref<2x16x256xf32, #tpu.memory_space<vmem>>, vector<2x16x256xf32>
    %cst = arith.constant dense<0.000000e+00> : vector<2x16xf32>
    %1 = vector.multi_reduction <add>, %0, %cst [2] : vector<2x16x256xf32> to vector<2x16xf32>
    %cst_2 = arith.constant 2.560000e+02 : f32
    %2 = vector.broadcast %cst_2 : f32 to vector<2x16xf32>
    %3 = arith.divf %1, %2 : vector<2x16xf32>
    %cst_3 = arith.constant dense<0xFF800000> : vector<2x16xf32>
    %4 = vector.multi_reduction <maximumf>, %0, %cst_3 [2] : vector<2x16x256xf32> to vector<2x16xf32>
    %5 = arith.addf %3, %4 : vector<2x16xf32>
    %c0_4 = arith.constant 0 : index
    %c0_5 = arith.constant 0 : index
    %6 = vector.load %arg2[%c0_4, %c0_5] : memref<16x16xf32, #tpu.memory_space<vmem>>, vector<16x16xf32>
    %cst_6 = arith.constant dense<0.000000e+00> : vector<2x16xf32>
    %7 = tpu.matmul %5, %6, %cst_6 {dimension_numbers = #tpu.dot_dimension_numbers<[1], [0], [0], [1], [0, 0, 1, 1], [], []>} : vector<2x16xf32>, vector<16x16xf32>, vector<2x16xf32> -> vector<2x16xf32>
    %8 = arith.negf %7 : vector<2x16xf32>
    %9 = math.exp %8 : vector<2x16xf32>
    %cst_7 = arith.constant 1.000000e+00 : f32
    %10 = vector.broadcast %cst_7 : f32 to vector<2x16xf32>
    %11 = arith.addf %10, %9 : vector<2x16xf32>
    %12 = arith.divf %10, %11 : vector<2x16xf32>
    %13 = vector.shape_cast %12 : vector<2x16xf32> to vector<2x16x1xf32>
    %14 = vector.broadcast %13 : vector<2x16x1xf32> to vector<2x16x256xf32>
    %15 = arith.mulf %0, %14 : vector<2x16x256xf32>
    %c0_8 = arith.constant 0 : index
    %c0_9 = arith.constant 0 : index
    %16 = vector.load %arg3[%c0_8, %c0_9] : memref<8x16xf32, #tpu.memory_space<vmem>>, vector<8x16xf32>
    %c0_10 = arith.constant 0 : index
    %c0_11 = arith.constant 0 : index
    %17 = vector.load %arg4[%c0_10, %c0_11] : memref<8x1xf32, #tpu.memory_space<vmem>>, vector<8x1xf32>
    %18 = vector.extract_strided_slice %15 {offsets = [0, 0, 0], sizes = [1, 16, 256], strides = [1, 1, 1]} : vector<2x16x256xf32> to vector<1x16x256xf32>
    %19 = vector.shape_cast %18 : vector<1x16x256xf32> to vector<16x256xf32>
    %cst_12 = arith.constant dense<0.000000e+00> : vector<8x256xf32>
    %20 = tpu.matmul %16, %19, %cst_12 {dimension_numbers = #tpu.dot_dimension_numbers<[1], [0], [0], [1], [0, 0, 1, 1], [], []>} : vector<8x16xf32>, vector<16x256xf32>, vector<8x256xf32> -> vector<8x256xf32>
    %21 = vector.broadcast %17 : vector<8x1xf32> to vector<8x256xf32>
    %22 = arith.addf %20, %21 : vector<8x256xf32>
    %c0_13 = arith.constant 0 : index
    %c0_14 = arith.constant 0 : index
    %c0_15 = arith.constant 0 : index
    %23 = vector.load %arg9[%c0_13, %c0_14, %c0_15] : memref<2x8x256xf32, #tpu.memory_space<vmem>>, vector<1x8x256xf32>
    %24 = vector.shape_cast %23 : vector<1x8x256xf32> to vector<8x256xf32>
    %25 = vector.shape_cast %22 : vector<8x256xf32> to vector<1x8x256xf32>
    tpu.vector_store %arg9[%c0_13, %c0_14, %c0_15], %25 {strides = array<i32>} : memref<2x8x256xf32, #tpu.memory_space<vmem>>, vector<1x8x256xf32>,
    %26 = vector.extract_strided_slice %15 {offsets = [1, 0, 0], sizes = [1, 16, 256], strides = [1, 1, 1]} : vector<2x16x256xf32> to vector<1x16x256xf32>
    %27 = vector.shape_cast %26 : vector<1x16x256xf32> to vector<16x256xf32>
    %cst_16 = arith.constant dense<0.000000e+00> : vector<8x256xf32>
    %28 = tpu.matmul %16, %27, %cst_16 {dimension_numbers = #tpu.dot_dimension_numbers<[1], [0], [0], [1], [0, 0, 1, 1], [], []>} : vector<8x16xf32>, vector<16x256xf32>, vector<8x256xf32> -> vector<8x256xf32>
    %29 = vector.broadcast %17 : vector<8x1xf32> to vector<8x256xf32>
    %30 = arith.addf %28, %29 : vector<8x256xf32>
    %c1 = arith.constant 1 : index
    %c0_17 = arith.constant 0 : index
    %c0_18 = arith.constant 0 : index
    %31 = vector.load %arg9[%c1, %c0_17, %c0_18] : memref<2x8x256xf32, #tpu.memory_space<vmem>>, vector<1x8x256xf32>
    %32 = vector.shape_cast %31 : vector<1x8x256xf32> to vector<8x256xf32>
    %33 = vector.shape_cast %30 : vector<8x256xf32> to vector<1x8x256xf32>
    tpu.vector_store %arg9[%c1, %c0_17, %c0_18], %33 {strides = array<i32>} : memref<2x8x256xf32, #tpu.memory_space<vmem>>, vector<1x8x256xf32>,
    %c0_19 = arith.constant 0 : index
    %c0_20 = arith.constant 0 : index
    %c0_21 = arith.constant 0 : index
    %34 = vector.load %arg9[%c0_19, %c0_20, %c0_21] : memref<2x8x256xf32, #tpu.memory_space<vmem>>, vector<2x8x256xf32>
    %cst_22 = arith.constant dense<0xFF800000> : vector<2x256xf32>
    %35 = vector.multi_reduction <maximumf>, %34, %cst_22 [1] : vector<2x8x256xf32> to vector<2x256xf32>
    %cst_23 = arith.constant dense<0.000000e+00> : vector<2x256xf32>
    %36 = vector.multi_reduction <add>, %34, %cst_23 [1] : vector<2x8x256xf32> to vector<2x256xf32>
    %cst_24 = arith.constant 8.000000e+00 : f32
    %37 = vector.broadcast %cst_24 : f32 to vector<2x256xf32>
    %38 = arith.divf %36, %37 : vector<2x256xf32>
    %c0_25 = arith.constant 0 : index
    %c0_26 = arith.constant 0 : index
    %39 = vector.load %arg5[%c0_25, %c0_26] : memref<256x256xf32, #tpu.memory_space<vmem>>, vector<256x256xf32>
    %cst_27 = arith.constant dense<0.000000e+00> : vector<2x256xf32>
    %40 = tpu.matmul %35, %39, %cst_27 {dimension_numbers = #tpu.dot_dimension_numbers<[1], [0], [0], [1], [0, 0, 1, 1], [], []>} : vector<2x256xf32>, vector<256x256xf32>, vector<2x256xf32> -> vector<2x256xf32>
    %c0_28 = arith.constant 0 : index
    %c0_29 = arith.constant 0 : index
    %41 = vector.load %arg6[%c0_28, %c0_29] : memref<256x256xf32, #tpu.memory_space<vmem>>, vector<256x256xf32>
    %cst_30 = arith.constant dense<0.000000e+00> : vector<2x256xf32>
    %42 = tpu.matmul %38, %41, %cst_30 {dimension_numbers = #tpu.dot_dimension_numbers<[1], [0], [0], [1], [0, 0, 1, 1], [], []>} : vector<2x256xf32>, vector<256x256xf32>, vector<2x256xf32> -> vector<2x256xf32>
    %43 = arith.addf %40, %42 : vector<2x256xf32>
    %c0_31 = arith.constant 0 : index
    %44 = memref.load %arg7[%c0_31] : memref<2xf32, #tpu.memory_space<smem>>
    %45 = vector.broadcast %44 : f32 to vector<2x256xf32>
    %46 = arith.mulf %43, %45 : vector<2x256xf32>
    %c1_32 = arith.constant 1 : index
    %47 = memref.load %arg7[%c1_32] : memref<2xf32, #tpu.memory_space<smem>>
    %48 = vector.broadcast %47 : f32 to vector<2x256xf32>
    %49 = arith.addf %46, %48 : vector<2x256xf32>
    %50 = arith.negf %49 : vector<2x256xf32>
    %51 = math.exp %50 : vector<2x256xf32>
    %cst_33 = arith.constant 1.000000e+00 : f32
    %52 = vector.broadcast %cst_33 : f32 to vector<2x256xf32>
    %53 = arith.addf %52, %51 : vector<2x256xf32>
    %54 = arith.divf %52, %53 : vector<2x256xf32>
    %55 = vector.shape_cast %54 : vector<2x256xf32> to vector<2x1x256xf32>
    %56 = vector.broadcast %55 : vector<2x1x256xf32> to vector<2x8x256xf32>
    %57 = arith.mulf %34, %56 : vector<2x8x256xf32>
    %c0_34 = arith.constant 0 : index
    %c0_35 = arith.constant 0 : index
    %c0_36 = arith.constant 0 : index
    %58 = vector.load %arg8[%c0_34, %c0_35, %c0_36] : memref<2x8x256xf32, #tpu.memory_space<vmem>>, vector<2x8x256xf32>
    tpu.vector_store %arg8[%c0_34, %c0_35, %c0_36], %57 {strides = array<i32>} : memref<2x8x256xf32, #tpu.memory_space<vmem>>, vector<2x8x256xf32>,
    return
  }
  func.func @transform_0(%arg0: i32) -> (i32, i32, i32) {
    %c0_i32 = arith.constant 0 : i32
    %c0_i32_0 = arith.constant 0 : i32
    %c0_i32_1 = arith.constant 0 : i32
    return %arg0, %c0_i32, %c0_i32_0 : i32, i32, i32
  }
  func.func @transform_1(%arg0: i32) -> (i32, i32) {
    %c0_i32 = arith.constant 0 : i32
    %c0_i32_0 = arith.constant 0 : i32
    %c0_i32_1 = arith.constant 0 : i32
    return %c0_i32, %c0_i32_0 : i32, i32
  }
  func.func @transform_2(%arg0: i32) -> (i32, i32) {
    %c0_i32 = arith.constant 0 : i32
    %c0_i32_0 = arith.constant 0 : i32
    %c0_i32_1 = arith.constant 0 : i32
    return %c0_i32, %c0_i32_0 : i32, i32
  }
  func.func @transform_3(%arg0: i32) -> (i32, i32) {
    %c0_i32 = arith.constant 0 : i32
    %c0_i32_0 = arith.constant 0 : i32
    %c0_i32_1 = arith.constant 0 : i32
    return %c0_i32, %c0_i32_0 : i32, i32
  }
  func.func @transform_4(%arg0: i32) -> (i32, i32) {
    %c0_i32 = arith.constant 0 : i32
    %c0_i32_0 = arith.constant 0 : i32
    %c0_i32_1 = arith.constant 0 : i32
    return %c0_i32, %c0_i32_0 : i32, i32
  }
  func.func @transform_5(%arg0: i32) -> (i32, i32) {
    %c0_i32 = arith.constant 0 : i32
    %c0_i32_0 = arith.constant 0 : i32
    %c0_i32_1 = arith.constant 0 : i32
    return %c0_i32, %c0_i32_0 : i32, i32
  }
  func.func @transform_6(%arg0: i32) -> i32 {
    %c0_i32 = arith.constant 0 : i32
    %c0_i32_0 = arith.constant 0 : i32
    return %c0_i32 : i32
  }
  func.func @transform_7(%arg0: i32) -> (i32, i32, i32) {
    %c0_i32 = arith.constant 0 : i32
    %c0_i32_0 = arith.constant 0 : i32
    %c0_i32_1 = arith.constant 0 : i32
    return %arg0, %c0_i32, %c0_i32_0 : i32, i32, i32
  }
}

</mosaic_0001>

<llo_original>
// kernel: tpu_custom_call.1
$region0: #{tpu_custom_call.1}
  #allocation0 [shape = 'u32[]', space=smem, size = 0x4, offset = 0x4, fixed_abs, tag = 'smem constant byte address 0x4 - core index']
  #allocation1 [shape = 'u32[144,128]{1,0:T(1,128)}', space=vmem, size = 0x12000, scoped, tag = 'internal scratch']
  #allocation2 [shape = 'f32[2,8,256]{2,1,0:T(8,128)}', space=vmem, size = 0x4000, scoped, tag = 'scratch operand']
  %s0 = inlined_call_operand.hbm [shape: f32[2,16,256], index: 0, kind: input, shape index: {}]
  %s1 = inlined_call_operand.hbm [shape: f32[16,16], index: 1, kind: input, shape index: {}]
  %s2 = inlined_call_operand.vmem [shape: f32[8,16], index: 2, kind: input, shape index: {}]
  %s3 = inlined_call_operand.vmem [shape: f32[8,1], index: 3, kind: input, shape index: {}]
  %s4 = inlined_call_operand.hbm [shape: f32[256,256], index: 4, kind: input, shape index: {}]
  %s5 = inlined_call_operand.hbm [shape: f32[256,256], index: 5, kind: input, shape index: {}]
  %s6 = inlined_call_operand.vmem [shape: f32[2], index: 6, kind: input, shape index: {}]
  %s7 = inlined_call_operand.hbm [shape: f32[2,8,256], index: 7, kind: output, shape index: {}]
  %s8 = sld [smem:[#allocation0]]
  $region58: #{tpu_custom_call.1} parent=0
    _
  %s10 = ssub.s32 1, %s8
  %s11 = scalar_select 0, %s10, %s8
  $region1: #{tpu_custom_call.1} parent=0
    #allocation3 [shape = 'u8[32768]{0}', space=vmem, size = 0x8000, scoped, tag = 'input window, operand 0, single buffered']
    #allocation4 [shape = 's32[1]{0}', space=sflag, size = 0x4, scoped, tag = 'scoped memory for tpu_custom_call.1']
    #allocation5 [shape = 's32[1]{0}', space=sflag, size = 0x4, scoped, tag = 'scoped memory for tpu_custom_call.1']
    #allocation6 [shape = 's32[1]{0}', space=sflag, size = 0x4, scoped, tag = 'scoped memory for tpu_custom_call.1']
    #allocation7 [shape = 'u8[8192]{0}', space=vmem, size = 0x2000, scoped, tag = 'input window, operand 1, single buffered']
    #allocation8 [shape = 's32[1]{0}', space=sflag, size = 0x4, scoped, tag = 'scoped memory for tpu_custom_call.1']
    #allocation9 [shape = 'u8[262144]{0}', space=vmem, size = 0x40000, scoped, tag = 'input window, operand 4, single buffered']
    #allocation10 [shape = 'u8[262144]{0}', space=vmem, size = 0x40000, scoped, tag = 'input window, operand 5, single buffered']
    #allocation11 [shape = 's32[1]{0}', space=sflag, size = 0x4, scoped, tag = 'scoped memory for tpu_custom_call.1']
    #allocation12 [shape = 'u8[512]{0}', space=smem, size = 0x200, scoped, tag = 'input window, operand 6, single buffered']
    #allocation13 [shape = 'u8[16384]{0}', space=vmem, size = 0x4000, scoped, tag = 'output window, operand 0, single buffered']
    %12 = vsyncpa [#allocation4], 0
    %13 = vsyncpa [#allocation8], 0
    %14 = vsyncpa [#allocation11], 0
    %15 = vsyncpa [#allocation6], 0
    %16 = vsyncpa [#allocation5], 0
    // Predicated region
    $region2: #{tpu_custom_call.1} parent=1 // pred_check
      _
    $region3: #{tpu_custom_call.1} parent=1 // pred_check_branch
      %18 = sbr.rel (0) target = $region5
    $region4: #{tpu_custom_call.1} parent=1 // pred_region
      %s20 = ssub.s32 1024, 1024
      %21 = vsyncadd [#allocation4], %s20
      %s22 = sshll.u32 [#allocation3], 4
      %s23 = int_to_ptr.vmem [resolvable:$true] %s22
      %28 = dma.hbm_to_vmem [thread:$0]  %s0, 1024, %s23, [#allocation4], 256, 256, 16
    $region5: #{tpu_custom_call.1} parent=1 // pred_fallthru
      _
    // Predicated region
    $region6: #{tpu_custom_call.1} parent=1 // pred_check
      _
    $region7: #{tpu_custom_call.1} parent=1 // pred_check_branch
      %30 = sbr.rel (0) target = $region9
    $region8: #{tpu_custom_call.1} parent=1 // pred_region
      %s32 = ssub.s32 256, 256
      %33 = vsyncadd [#allocation8], %s32
      %s34 = sshll.u32 [#allocation7], 4
      %s35 = int_to_ptr.vmem [resolvable:$true] %s34
      %40 = dma.hbm_to_vmem [thread:$0]  %s1, 256, %s35, [#allocation8], 128, 128, 8
    $region9: #{tpu_custom_call.1} parent=1 // pred_fallthru
      _
    // Predicated region
    $region10: #{tpu_custom_call.1} parent=1 // pred_check
      _
    $region11: #{tpu_custom_call.1} parent=1 // pred_check_branch
      %42 = sbr.rel (0) target = $region13
    $region12: #{tpu_custom_call.1} parent=1 // pred_region
      _
    $region13: #{tpu_custom_call.1} parent=1 // pred_fallthru
      _
    // Predicated region
    $region14: #{tpu_custom_call.1} parent=1 // pred_check
      _
    $region15: #{tpu_custom_call.1} parent=1 // pred_check_branch
      %44 = sbr.rel (0) target = $region17
    $region16: #{tpu_custom_call.1} parent=1 // pred_region
      _
    $region17: #{tpu_custom_call.1} parent=1 // pred_fallthru
      _
    // Predicated region
    $region18: #{tpu_custom_call.1} parent=1 // pred_check
      _
    $region19: #{tpu_custom_call.1} parent=1 // pred_check_branch
      %46 = sbr.rel (0) target = $region21
    $region20: #{tpu_custom_call.1} parent=1 // pred_region
      %s48 = ssub.s32 8192, 8192
      %49 = vsyncadd [#allocation8], %s48
      %s50 = sshll.u32 [#allocation9], 4
      %s51 = int_to_ptr.vmem [resolvable:$true] %s50
      %56 = dma.hbm_to_vmem [thread:$0]  %s4, 8192, %s51, [#allocation8], 256, 256, 16
    $region21: #{tpu_custom_call.1} parent=1 // pred_fallthru
      _
    // Predicated region
    $region22: #{tpu_custom_call.1} parent=1 // pred_check
      _
    $region23: #{tpu_custom_call.1} parent=1 // pred_check_branch
      %58 = sbr.rel (0) target = $region25
    $region24: #{tpu_custom_call.1} parent=1 // pred_region
      %s60 = ssub.s32 8192, 8192
      %61 = vsyncadd [#allocation11], %s60
      %s62 = sshll.u32 [#allocation10], 4
      %s63 = int_to_ptr.vmem [resolvable:$true] %s62
      %68 = dma.hbm_to_vmem [thread:$0]  %s5, 8192, %s63, [#allocation11], 256, 256, 16
    $region25: #{tpu_custom_call.1} parent=1 // pred_fallthru
      _
    // Predicated region
    $region26: #{tpu_custom_call.1} parent=1 // pred_check
      _
    $region27: #{tpu_custom_call.1} parent=1 // pred_check_branch
      %70 = sbr.rel (0) target = $region29
    $region28: #{tpu_custom_call.1} parent=1 // pred_region
      %s72 = ssub.s32 16, 16
      %73 = vsyncadd [#allocation6], %s72
      %s75 = sshll.u32 %s6, 4
      %s76 = int_to_ptr.vmem [resolvable:$true] %s75
      %78 = dma.vmem_to_smem %s76, 16, [#allocation12], [#allocation6]
    $region29: #{tpu_custom_call.1} parent=1 // pred_fallthru
      _
    // Predicated region
    $region30: #{tpu_custom_call.1} parent=1 // pred_check
      _
    $region31: #{tpu_custom_call.1} parent=1 // pred_check_branch
      %80 = sbr.rel (0) target = $region33
    $region32: #{tpu_custom_call.1} parent=1 // pred_region
      %81 = dma.done [#allocation4], 1024
    $region33: #{tpu_custom_call.1} parent=1 // pred_fallthru
      _
    // Predicated region
    $region34: #{tpu_custom_call.1} parent=1 // pred_check
      _
    $region35: #{tpu_custom_call.1} parent=1 // pred_check_branch
      %83 = sbr.rel (0) target = $region37
    $region36: #{tpu_custom_call.1} parent=1 // pred_region
      %84 = dma.done [#allocation8], 256
    $region37: #{tpu_custom_call.1} parent=1 // pred_fallthru
      _
    // Predicated region
    $region38: #{tpu_custom_call.1} parent=1 // pred_check
      _
    $region39: #{tpu_custom_call.1} parent=1 // pred_check_branch
      %86 = sbr.rel (0) target = $region41
    $region40: #{tpu_custom_call.1} parent=1 // pred_region
      %87 = dma.done [#allocation8], 8192
    $region41: #{tpu_custom_call.1} parent=1 // pred_fallthru
      _
    // Predicated region
    $region42: #{tpu_custom_call.1} parent=1 // pred_check
      _
    $region43: #{tpu_custom_call.1} parent=1 // pred_check_branch
      %89 = sbr.rel (0) target = $region45
    $region44: #{tpu_custom_call.1} parent=1 // pred_region
      %90 = dma.done [#allocation11], 8192
    $region45: #{tpu_custom_call.1} parent=1 // pred_fallthru
      _
    // Predicated region
    $region46: #{tpu_custom_call.1} parent=1 // pred_check
      _
    $region47: #{tpu_custom_call.1} parent=1 // pred_check_branch
      %92 = sbr.rel (0) target = $region49
    $region48: #{tpu_custom_call.1} parent=1 // pred_region
      %93 = dma.done [#allocation6], 16
    $region49: #{tpu_custom_call.1} parent=1 // pred_fallthru
      _
    %94 = sfence
    %v95 = vld [vmem:[#allocation3] sm:$0xff]
    %v96 = vld [vmem:[#allocation3 + $0x8] sm:$0xff]
    %v97 = vld [vmem:[#allocation3 + $0x10] sm:$0xff]
    %v98 = vld [vmem:[#allocation3 + $0x18] sm:$0xff]
    %v99 = vld [vmem:[#allocation3 + $0x20] sm:$0xff]
    %v100 = vld [vmem:[#allocation3 + $0x28] sm:$0xff]
    %v101 = vld [vmem:[#allocation3 + $0x30] sm:$0xff]
    %v102 = vld [vmem:[#allocation3 + $0x38] sm:$0xff]
    %v103 = vadd.f32 %v95, %v96
    %104 = vadd.xlane.f32.xlu0 %v103
    %v105 = vpop.xlane.xlu0 %104
    %v106 = vadd.f32 %v97, %v98
    %107 = vadd.xlane.f32.xlu0 %v106
    %v108 = vpop.xlane.xlu0 %107
    %v109 = vadd.f32 %v99, %v100
    %110 = vadd.xlane.f32.xlu0 %v109
    %v111 = vpop.xlane.xlu0 %110
    %v112 = vadd.f32 %v101, %v102
    %113 = vadd.xlane.f32.xlu0 %v112
    %v114 = vpop.xlane.xlu0 %113
    %v115 = vrcp.pop 256.0
    %v116 = vmul.f32 %v105, %v115
    %v117 = vmul.f32 %v108, %v115
    %v118 = vmul.f32 %v111, %v115
    %v119 = vmul.f32 %v114, %v115
    %v120 = vmax.f32 %v95, %v96
    %121 = vmax.xlane.f32.xlu0 %v120
    %v122 = vpop.xlane.xlu0 %121
    %v123 = vmax.f32 %v97, %v98
    %124 = vmax.xlane.f32.xlu0 %v123
    %v125 = vpop.xlane.xlu0 %124
    %v126 = vmax.f32 %v99, %v100
    %127 = vmax.xlane.f32.xlu0 %v126
    %v128 = vpop.xlane.xlu0 %127
    %v129 = vmax.f32 %v101, %v102
    %130 = vmax.xlane.f32.xlu0 %v129
    %v131 = vpop.xlane.xlu0 %130
    %v132 = vadd.f32 %v116, %v122
    %v133 = vadd.f32 %v117, %v125
    %v134 = vadd.f32 %v118, %v128
    %v135 = vadd.f32 %v119, %v131
    %v136 = vld [vmem:[#allocation7] sm:$0xff]
    %v137 = vld [vmem:[#allocation7 + $0x8] sm:$0xff]
    %v142 = vlaneseq
    %v143 = vand.u32 %v142, 127
    %v144 = vlaneseq
    %v145 = vshrl.u32 %v144, 7
    %v146 = vsub.s32 %v143, %v145
    %v147 = vrot.slane %v132, %v146
    %v148 = vadd.s32 %v143, 4294967288
    %v149 = vlaneseq
    %v150 = vshrl.u32 %v149, 7
    %v151 = vsub.s32 %v148, %v150
    %v152 = vrot.slane %v133, %v151
    %vm153 = vcmask 130112
    %v154 = vsel %vm153, %v152, %v147
    %v155 = vlaneseq
    %v156 = vshrl.u32 %v155, 7
    %v157 = vsub.s32 %v143, %v156
    %v158 = vrot.slane %v134, %v157
    %v159 = vlaneseq
    %v160 = vshrl.u32 %v159, 7
    %v161 = vsub.s32 %v148, %v160
    %v162 = vrot.slane %v135, %v161
    %v163 = vsel %vm153, %v162, %v158
    %vm164 = vcmask 1041409
    %v165 = vsel %vm164, %v163, %v154
    %vm166 = vcmask 130048
    %v167 = vsel %vm166, %v165, 0
    %169 = vmatprep.subr.mxu0 0.0
    %170 = vmatpush1.msra.mxu0 %v136
    %171 = vmatprep.subr.mxu0 0.0
    %172 = vmatpush1.msra.mxu0 %v137
    %173 = vmatprep.subr.mxu0 0.0
    %174 = vmatpush1.msra.mxu0 0.0
    %175 = vmatprep.subr.mxu0 0.0
    %176 = vmatpush1.msra.mxu0 0.0
    %177 = vmatprep.subr.mxu0 0.0
    %178 = vmatpush1.msra.mxu0 0.0
    %179 = vmatprep.subr.mxu0 0.0
    %180 = vmatpush1.msra.mxu0 0.0
    %181 = vmatprep.subr.mxu0 0.0
    %182 = vmatpush1.msra.mxu0 0.0
    %183 = vmatprep.subr.mxu0 0.0
    %184 = vmatpush1.msra.mxu0 0.0
    %185 = vmatprep.subr.mxu0 0.0
    %186 = vmatpush1.msra.mxu0 0.0
    %187 = vmatprep.subr.mxu0 0.0
    %188 = vmatpush1.msra.mxu0 0.0
    %189 = vmatprep.subr.mxu0 0.0
    %190 = vmatpush1.msra.mxu0 0.0
    %191 = vmatprep.subr.mxu0 0.0
    %192 = vmatpush1.msra.mxu0 0.0
    %193 = vmatprep.subr.mxu0 0.0
    %194 = vmatpush1.msra.mxu0 0.0
    %195 = vmatprep.subr.mxu0 0.0
    %196 = vmatpush1.msra.mxu0 0.0
    %197 = vmatprep.subr.mxu0 0.0
    %198 = vmatpush1.msra.mxu0 0.0
    %199 = vmatprep.subr.mxu0 0.0
    %200 = vmatpush1.msra.mxu0 0.0
    %201 = vmatprep.subr.mxu0 0.0
    %202 = vmatpush1.msra.mxu0 0.0
    %203 = vmatprep.subr.mxu0 0.0
    %204 = vmatpush1.msra.mxu0 0.0
    %205 = vmatprep.subr.mxu0 0.0
    %206 = vmatpush1.msra.mxu0 0.0
    %207 = vmatprep.subr.mxu0 0.0
    %208 = vmatpush1.msra.mxu0 0.0
    %209 = vmatprep.subr.mxu0 0.0
    %210 = vmatpush1.msra.mxu0 0.0
    %211 = vmatprep.subr.mxu0 0.0
    %212 = vmatpush1.msra.mxu0 0.0
    %213 = vmatprep.subr.mxu0 0.0
    %214 = vmatpush1.msra.mxu0 0.0
    %215 = vmatprep.subr.mxu0 0.0
    %216 = vmatpush1.msra.mxu0 0.0
    %217 = vmatprep.subr.mxu0 0.0
    %218 = vmatpush1.msra.mxu0 0.0
    %219 = vmatprep.subr.mxu0 0.0
    %220 = vmatpush1.msra.mxu0 0.0
    %221 = vmatprep.subr.mxu0 0.0
    %222 = vmatpush1.msra.mxu0 0.0
    %223 = vmatprep.subr.mxu0 0.0
    %224 = vmatpush1.msra.mxu0 0.0
    %225 = vmatprep.subr.mxu0 0.0
    %226 = vmatpush1.msra.mxu0 0.0
    %227 = vmatprep.subr.mxu0 0.0
    %228 = vmatpush1.msra.mxu0 0.0
    %229 = vmatprep.subr.mxu0 0.0
    %230 = vmatpush1.msra.mxu0 0.0
    %231 = vmatprep.subr.mxu0 0.0
    %232 = vmatpush1.msra.mxu0 0.0
    %233 = vmatprep.mubr.f32.mxu0 0.0
    %234 = vmatmul.mubr.f32.gmra.mrb[0].mxu0 %v167
    %v235 = vpop.f32.mrb[0].mxu0
    %v236 = vadd.f32 0.0, %v235
    %v237 = vpop.f32.mrb[0].mxu0
    %238 = vdwg.mxu0
    %v239 = vxor.u32 %v236, 2147483648
    %v240 = vmul.f32 %v239, 1.442695
    %v241 = vpow.pop %v240
    %v242 = vadd.f32 %v241, 1.0
    %v243 = vrcp.pop %v242
    %v244 = vmul.f32 1.0, %v243
    %v245 = vlaneseq
    %v246 = vshrl.u32 %v245, 7
    %v247 = vsub.s32 0, %v246
    %v248 = vrot.slane %v244, %v247
    %250 = vbcast.lane.b32.xlu0 %v248, 256
    %v251 = vpop.permute.xlu0 %250
    %s253 = sor.u32 256, 8
    %254 = vbcast.lane.b32.xlu0 %v248, %s253
    %v255 = vpop.permute.xlu0 %254
    %v256 = vlaneseq
    %v257 = vshrl.u32 %v256, 7
    %v258 = vsub.s32 1, %v257
    %v259 = vrot.slane %v244, %v258
    %261 = vbcast.lane.b32.xlu0 %v259, 256
    %v262 = vpop.permute.xlu0 %261
    %s264 = sor.u32 256, 8
    %265 = vbcast.lane.b32.xlu0 %v259, %s264
    %v266 = vpop.permute.xlu0 %265
    %v267 = vmul.f32 %v95, %v251
    %v268 = vmul.f32 %v96, %v251
    %v269 = vmul.f32 %v97, %v255
    %v270 = vmul.f32 %v98, %v255
    %v271 = vmul.f32 %v99, %v262
    %v272 = vmul.f32 %v100, %v262
    %v273 = vmul.f32 %v101, %v266
    %v274 = vmul.f32 %v102, %v266
    %v275 = vld [vmem:[%s2] sm:$0xff]
    %v276 = vld [vmem:[%s3] sm:$0xff]
    %278 = vset.pattern.permute.xlu0 0
    %279 = vperm.xlu0 %278, %v276
    %v280 = vpop.permute.xlu0 %279
    %v283 = vsel %vm166, %v275, 0
    %285 = vmatprep.subr.mxu0 %v268
    %286 = vmatpush1.msra.mxu0 %v267
    %287 = vmatprep.subr.mxu0 %v270
    %288 = vmatpush1.msra.mxu0 %v269
    %289 = vmatprep.subr.mxu0 0.0
    %290 = vmatpush1.msra.mxu0 0.0
    %291 = vmatprep.subr.mxu0 0.0
    %292 = vmatpush1.msra.mxu0 0.0
    %293 = vmatprep.subr.mxu0 0.0
    %294 = vmatpush1.msra.mxu0 0.0
    %295 = vmatprep.subr.mxu0 0.0
    %296 = vmatpush1.msra.mxu0 0.0
    %297 = vmatprep.subr.mxu0 0.0
    %298 = vmatpush1.msra.mxu0 0.0
    %299 = vmatprep.subr.mxu0 0.0
    %300 = vmatpush1.msra.mxu0 0.0
    %301 = vmatprep.subr.mxu0 0.0
    %302 = vmatpush1.msra.mxu0 0.0
    %303 = vmatprep.subr.mxu0 0.0
    %304 = vmatpush1.msra.mxu0 0.0
    %305 = vmatprep.subr.mxu0 0.0
    %306 = vmatpush1.msra.mxu0 0.0
    %307 = vmatprep.subr.mxu0 0.0
    %308 = vmatpush1.msra.mxu0 0.0
    %309 = vmatprep.subr.mxu0 0.0
    %310 = vmatpush1.msra.mxu0 0.0
    %311 = vmatprep.subr.mxu0 0.0
    %312 = vmatpush1.msra.mxu0 0.0
    %313 = vmatprep.subr.mxu0 0.0
    %314 = vmatpush1.msra.mxu0 0.0
    %315 = vmatprep.subr.mxu0 0.0
    %316 = vmatpush1.msra.mxu0 0.0
    %317 = vmatprep.subr.mxu0 0.0
    %318 = vmatpush1.msra.mxu0 0.0
    %319 = vmatprep.subr.mxu0 0.0
    %320 = vmatpush1.msra.mxu0 0.0
    %321 = vmatprep.subr.mxu0 0.0
    %322 = vmatpush1.msra.mxu0 0.0
    %323 = vmatprep.subr.mxu0 0.0
    %324 = vmatpush1.msra.mxu0 0.0
    %325 = vmatprep.subr.mxu0 0.0
    %326 = vmatpush1.msra.mxu0 0.0
    %327 = vmatprep.subr.mxu0 0.0
    %328 = vmatpush1.msra.mxu0 0.0
    %329 = vmatprep.subr.mxu0 0.0
    %330 = vmatpush1.msra.mxu0 0.0
    %331 = vmatprep.subr.mxu0 0.0
    %332 = vmatpush1.msra.mxu0 0.0
    %333 = vmatprep.subr.mxu0 0.0
    %334 = vmatpush1.msra.mxu0 0.0
    %335 = vmatprep.subr.mxu0 0.0
    %336 = vmatpush1.msra.mxu0 0.0
    %337 = vmatprep.subr.mxu0 0.0
    %338 = vmatpush1.msra.mxu0 0.0
    %339 = vmatprep.subr.mxu0 0.0
    %340 = vmatpush1.msra.mxu0 0.0
    %341 = vmatprep.subr.mxu0 0.0
    %342 = vmatpush1.msra.mxu0 0.0
    %343 = vmatprep.subr.mxu0 0.0
    %344 = vmatpush1.msra.mxu0 0.0
    %345 = vmatprep.subr.mxu0 0.0
    %346 = vmatpush1.msra.mxu0 0.0
    %347 = vmatprep.subr.mxu0 0.0
    %348 = vmatpush1.msra.mxu0 0.0
    %349 = vmatprep.mubr.f32.mxu0 0.0
    %350 = vmatmul.mubr.f32.gmra.mrb[0].mxu0 %v283
    %v351 = vpop.f32.mrb[0].mxu0
    %v352 = vadd.f32 %v280, %v351
    %v353 = vpop.f32.mrb[0].mxu0
    %v354 = vadd.f32 %v280, %v353
    %355 = vdwg.mxu0
    %356 = vst [vmem:[#allocation2] sm:$0xff] %v352
    %357 = vst [vmem:[#allocation2 + $0x8] sm:$0xff] %v354
    %358 = vmatprep.subr.mxu0 %v272
    %359 = vmatpush1.msra.mxu0 %v271
    %360 = vmatprep.subr.mxu0 %v274
    %361 = vmatpush1.msra.mxu0 %v273
    %362 = vmatprep.subr.mxu0 0.0
    %363 = vmatpush1.msra.mxu0 0.0
    %364 = vmatprep.subr.mxu0 0.0
    %365 = vmatpush1.msra.mxu0 0.0
    %366 = vmatprep.subr.mxu0 0.0
    %367 = vmatpush1.msra.mxu0 0.0
    %368 = vmatprep.subr.mxu0 0.0
    %369 = vmatpush1.msra.mxu0 0.0
    %370 = vmatprep.subr.mxu0 0.0
    %371 = vmatpush1.msra.mxu0 0.0
    %372 = vmatprep.subr.mxu0 0.0
    %373 = vmatpush1.msra.mxu0 0.0
    %374 = vmatprep.subr.mxu0 0.0
    %375 = vmatpush1.msra.mxu0 0.0
    %376 = vmatprep.subr.mxu0 0.0
    %377 = vmatpush1.msra.mxu0 0.0
    %378 = vmatprep.subr.mxu0 0.0
    %379 = vmatpush1.msra.mxu0 0.0
    %380 = vmatprep.subr.mxu0 0.0
    %381 = vmatpush1.msra.mxu0 0.0
    %382 = vmatprep.subr.mxu0 0.0
    %383 = vmatpush1.msra.mxu0 0.0
    %384 = vmatprep.subr.mxu0 0.0
    %385 = vmatpush1.msra.mxu0 0.0
    %386 = vmatprep.subr.mxu0 0.0
    %387 = vmatpush1.msra.mxu0 0.0
    %388 = vmatprep.subr.mxu0 0.0
    %389 = vmatpush1.msra.mxu0 0.0
    %390 = vmatprep.subr.mxu0 0.0
    %391 = vmatpush1.msra.mxu0 0.0
    %392 = vmatprep.subr.mxu0 0.0
    %393 = vmatpush1.msra.mxu0 0.0
    %394 = vmatprep.subr.mxu0 0.0
    %395 = vmatpush1.msra.mxu0 0.0
    %396 = vmatprep.subr.mxu0 0.0
    %397 = vmatpush1.msra.mxu0 0.0
    %398 = vmatprep.subr.mxu0 0.0
    %399 = vmatpush1.msra.mxu0 0.0
    %400 = vmatprep.subr.mxu0 0.0
    %401 = vmatpush1.msra.mxu0 0.0
    %402 = vmatprep.subr.mxu0 0.0
    %403 = vmatpush1.msra.mxu0 0.0
    %404 = vmatprep.subr.mxu0 0.0
    %405 = vmatpush1.msra.mxu0 0.0
    %406 = vmatprep.subr.mxu0 0.0
    %407 = vmatpush1.msra.mxu0 0.0
    %408 = vmatprep.subr.mxu0 0.0
    %409 = vmatpush1.msra.mxu0 0.0
    %410 = vmatprep.subr.mxu0 0.0
    %411 = vmatpush1.msra.mxu0 0.0
    %412 = vmatprep.subr.mxu0 0.0
    %413 = vmatpush1.msra.mxu0 0.0
    %414 = vmatprep.subr.mxu0 0.0
    %415 = vmatpush1.msra.mxu0 0.0
    %416 = vmatprep.subr.mxu0 0.0
    %417 = vmatpush1.msra.mxu0 0.0
    %418 = vmatprep.subr.mxu0 0.0
    %419 = vmatpush1.msra.mxu0 0.0
    %420 = vmatprep.subr.mxu0 0.0
    %421 = vmatpush1.msra.mxu0 0.0
    %422 = vmatprep.mubr.f32.mxu0 0.0
    %423 = vmatmul.mubr.f32.gmra.mrb[0].mxu0 %v283
    %v424 = vpop.f32.mrb[0].mxu0
    %v425 = vadd.f32 %v280, %v424
    %v426 = vpop.f32.mrb[0].mxu0
    %v427 = vadd.f32 %v280, %v426
    %428 = vdwg.mxu0
    %s429 = scalar_lea.vmem [#allocation2], 16
    %430 = vst [vmem:[%s429] sm:$0xff] %v425
    %431 = vst [vmem:[%s429 + $0x8] sm:$0xff] %v427
    %v432 = vld [vmem:[#allocation2] sm:$0xff]
    %v433 = vld [vmem:[#allocation2 + $0x8] sm:$0xff]
    %v434 = vld [vmem:[#allocation2 + $0x10] sm:$0xff]
    %v435 = vld [vmem:[#allocation2 + $0x18] sm:$0xff]
    %v436 = vrot.slane %v432, 4
    %v437 = vmax.f32 %v432, %v436
    %v438 = vrot.slane %v437, 2
    %v439 = vmax.f32 %v437, %v438
    %v440 = vrot.slane %v439, 1
    %v441 = vmax.f32 %v439, %v440
    %v442 = vrot.slane %v433, 4
    %v443 = vmax.f32 %v433, %v442
    %v444 = vrot.slane %v443, 2
    %v445 = vmax.f32 %v443, %v444
    %v446 = vrot.slane %v445, 1
    %v447 = vmax.f32 %v445, %v446
    %v448 = vrot.slane %v434, 4
    %v449 = vmax.f32 %v434, %v448
    %v450 = vrot.slane %v449, 2
    %v451 = vmax.f32 %v449, %v450
    %v452 = vrot.slane %v451, 1
    %v453 = vmax.f32 %v451, %v452
    %v454 = vrot.slane %v435, 4
    %v455 = vmax.f32 %v435, %v454
    %v456 = vrot.slane %v455, 2
    %v457 = vmax.f32 %v455, %v456
    %v458 = vrot.slane %v457, 1
    %v459 = vmax.f32 %v457, %v458
    %v460 = vrot.slane %v432, 4
    %v461 = vadd.f32 %v432, %v460
    %v462 = vrot.slane %v461, 2
    %v463 = vadd.f32 %v461, %v462
    %v464 = vrot.slane %v463, 1
    %v465 = vadd.f32 %v463, %v464
    %v466 = vrot.slane %v433, 4
    %v467 = vadd.f32 %v433, %v466
    %v468 = vrot.slane %v467, 2
    %v469 = vadd.f32 %v467, %v468
    %v470 = vrot.slane %v469, 1
    %v471 = vadd.f32 %v469, %v470
    %v472 = vrot.slane %v434, 4
    %v473 = vadd.f32 %v434, %v472
    %v474 = vrot.slane %v473, 2
    %v475 = vadd.f32 %v473, %v474
    %v476 = vrot.slane %v475, 1
    %v477 = vadd.f32 %v475, %v476
    %v478 = vrot.slane %v435, 4
    %v479 = vadd.f32 %v435, %v478
    %v480 = vrot.slane %v479, 2
    %v481 = vadd.f32 %v479, %v480
    %v482 = vrot.slane %v481, 1
    %v483 = vadd.f32 %v481, %v482
    %v484 = vrcp.pop 8.0
    %v485 = vmul.f32 %v465, %v484
    %v486 = vmul.f32 %v471, %v484
    %v487 = vmul.f32 %v477, %v484
    %v488 = vmul.f32 %v483, %v484
    %v489 = vld [vmem:[#allocation9] sm:$0xff]
    %v490 = vld [vmem:[#allocation9 + $0x8] sm:$0xff]
    %v491 = vld [vmem:[#allocation9 + $0x10] sm:$0xff]
    %v492 = vld [vmem:[#allocation9 + $0x18] sm:$0xff]
    %v493 = vld [vmem:[#allocation9 + $0x20] sm:$0xff]
    %v494 = vld [vmem:[#allocation9 + $0x28] sm:$0xff]
    %v495 = vld [vmem:[#allocation9 + $0x30] sm:$0xff]
    %v496 = vld [vmem:[#allocation9 + $0x38] sm:$0xff]
    %v497 = vld [vmem:[#allocation9 + $0x40] sm:$0xff]
    %v498 = vld [vmem:[#allocation9 + $0x48] sm:$0xff]
    %v499 = vld [vmem:[#allocation9 + $0x50] sm:$0xff]
    %v500 = vld [vmem:[#allocation9 + $0x58] sm:$0xff]
    %v501 = vld [vmem:[#allocation9 + $0x60] sm:$0xff]
    %v502 = vld [vmem:[#allocation9 + $0x68] sm:$0xff]
    %v503 = vld [vmem:[#allocation9 + $0x70] sm:$0xff]
    %v504 = vld [vmem:[#allocation9 + $0x78] sm:$0xff]
    %v505 = vld [vmem:[#allocation9 + $0x80] sm:$0xff]
    %v506 = vld [vmem:[#allocation9 + $0x88] sm:$0xff]
    %v507 = vld [vmem:[#allocation9 + $0x90] sm:$0xff]
    %v508 = vld [vmem:[#allocation9 + $0x98] sm:$0xff]
    %v509 = vld [vmem:[#allocation9 + $0xa0] sm:$0xff]
    %v510 = vld [vmem:[#allocation9 + $0xa8] sm:$0xff]
    %v511 = vld [vmem:[#allocation9 + $0xb0] sm:$0xff]
    %v512 = vld [vmem:[#allocation9 + $0xb8] sm:$0xff]
    %v513 = vld [vmem:[#allocation9 + $0xc0] sm:$0xff]
    %v514 = vld [vmem:[#allocation9 + $0xc8] sm:$0xff]
    %v515 = vld [vmem:[#allocation9 + $0xd0] sm:$0xff]
    %v516 = vld [vmem:[#allocation9 + $0xd8] sm:$0xff]
    %v517 = vld [vmem:[#allocation9 + $0xe0] sm:$0xff]
    %v518 = vld [vmem:[#allocation9 + $0xe8] sm:$0xff]
    %v519 = vld [vmem:[#allocation9 + $0xf0] sm:$0xff]
    %v520 = vld [vmem:[#allocation9 + $0xf8] sm:$0xff]
    %v521 = vld [vmem:[#allocation9 + $0x100] sm:$0xff]
    %v522 = vld [vmem:[#allocation9 + $0x108] sm:$0xff]
    %v523 = vld [vmem:[#allocation9 + $0x110] sm:$0xff]
    %v524 = vld [vmem:[#allocation9 + $0x118] sm:$0xff]
    %v525 = vld [vmem:[#allocation9 + $0x120] sm:$0xff]
    %v526 = vld [vmem:[#allocation9 + $0x128] sm:$0xff]
    %v527 = vld [vmem:[#allocation9 + $0x130] sm:$0xff]
    %v528 = vld [vmem:[#allocation9 + $0x138] sm:$0xff]
    %v529 = vld [vmem:[#allocation9 + $0x140] sm:$0xff]
    %v530 = vld [vmem:[#allocation9 + $0x148] sm:$0xff]
    %v531 = vld [vmem:[#allocation9 + $0x150] sm:$0xff]
    %v532 = vld [vmem:[#allocation9 + $0x158] sm:$0xff]
    %v533 = vld [vmem:[#allocation9 + $0x160] sm:$0xff]
    %v534 = vld [vmem:[#allocation9 + $0x168] sm:$0xff]
    %v535 = vld [vmem:[#allocation9 + $0x170] sm:$0xff]
    %v536 = vld [vmem:[#allocation9 + $0x178] sm:$0xff]
    %v537 = vld [vmem:[#allocation9 + $0x180] sm:$0xff]
    %v538 = vld [vmem:[#allocation9 + $0x188] sm:$0xff]
    %v539 = vld [vmem:[#allocation9 + $0x190] sm:$0xff]
    %v540 = vld [vmem:[#allocation9 + $0x198] sm:$0xff]
    %v541 = vld [vmem:[#allocation9 + $0x1a0] sm:$0xff]
    %v542 = vld [vmem:[#allocation9 + $0x1a8] sm:$0xff]
    %v543 = vld [vmem:[#allocation9 + $0x1b0] sm:$0xff]
    %v544 = vld [vmem:[#allocation9 + $0x1b8] sm:$0xff]
    %v545 = vld [vmem:[#allocation9 + $0x1c0] sm:$0xff]
    %v546 = vld [vmem:[#allocation9 + $0x1c8] sm:$0xff]
    %v547 = vld [vmem:[#allocation9 + $0x1d0] sm:$0xff]
    %v548 = vld [vmem:[#allocation9 + $0x1d8] sm:$0xff]
    %v549 = vld [vmem:[#allocation9 + $0x1e0] sm:$0xff]
    %v550 = vld [vmem:[#allocation9 + $0x1e8] sm:$0xff]
    %v551 = vld [vmem:[#allocation9 + $0x1f0] sm:$0xff]
    %v552 = vld [vmem:[#allocation9 + $0x1f8] sm:$0xff]
    %v553 = vld [vmem:[#allocation10] sm:$0xff]
    %v554 = vld [vmem:[#allocation10 + $0x8] sm:$0xff]
    %v555 = vld [vmem:[#allocation10 + $0x10] sm:$0xff]
    %v556 = vld [vmem:[#allocation10 + $0x18] sm:$0xff]
    %v557 = vld [vmem:[#allocation10 + $0x20] sm:$0xff]
    %v558 = vld [vmem:[#allocation10 + $0x28] sm:$0xff]
    %v559 = vld [vmem:[#allocation10 + $0x30] sm:$0xff]
    %v560 = vld [vmem:[#allocation10 + $0x38] sm:$0xff]
    %v561 = vld [vmem:[#allocation10 + $0x40] sm:$0xff]
    %v562 = vld [vmem:[#allocation10 + $0x48] sm:$0xff]
    %v563 = vld [vmem:[#allocation10 + $0x50] sm:$0xff]
    %v564 = vld [vmem:[#allocation10 + $0x58] sm:$0xff]
    %v565 = vld [vmem:[#allocation10 + $0x60] sm:$0xff]
    %v566 = vld [vmem:[#allocation10 + $0x68] sm:$0xff]
    %v567 = vld [vmem:[#allocation10 + $0x70] sm:$0xff]
    %v568 = vld [vmem:[#allocation10 + $0x78] sm:$0xff]
    %v569 = vld [vmem:[#allocation10 + $0x80] sm:$0xff]
    %v570 = vld [vmem:[#allocation10 + $0x88] sm:$0xff]
    %v571 = vld [vmem:[#allocation10 + $0x90] sm:$0xff]
    %v572 = vld [vmem:[#allocation10 + $0x98] sm:$0xff]
    %v573 = vld [vmem:[#allocation10 + $0xa0] sm:$0xff]
    %v574 = vld [vmem:[#allocation10 + $0xa8] sm:$0xff]
    %v575 = vld [vmem:[#allocation10 + $0xb0] sm:$0xff]
    %v576 = vld [vmem:[#allocation10 + $0xb8] sm:$0xff]
    %v577 = vld [vmem:[#allocation10 + $0xc0] sm:$0xff]
    %v578 = vld [vmem:[#allocation10 + $0xc8] sm:$0xff]
    %v579 = vld [vmem:[#allocation10 + $0xd0] sm:$0xff]
    %v580 = vld [vmem:[#allocation10 + $0xd8] sm:$0xff]
    %v581 = vld [vmem:[#allocation10 + $0xe0] sm:$0xff]
    %v582 = vld [vmem:[#allocation10 + $0xe8] sm:$0xff]
    %v583 = vld [vmem:[#allocation10 + $0xf0] sm:$0xff]
    %v584 = vld [vmem:[#allocation10 + $0xf8] sm:$0xff]
    %v585 = vld [vmem:[#allocation10 + $0x100] sm:$0xff]
    %v586 = vld [vmem:[#allocation10 + $0x108] sm:$0xff]
    %v587 = vld [vmem:[#allocation10 + $0x110] sm:$0xff]
    %v588 = vld [vmem:[#allocation10 + $0x118] sm:$0xff]
    %v589 = vld [vmem:[#allocation10 + $0x120] sm:$0xff]
    %v590 = vld [vmem:[#allocation10 + $0x128] sm:$0xff]
    %v591 = vld [vmem:[#allocation10 + $0x130] sm:$0xff]
    %v592 = vld [vmem:[#allocation10 + $0x138] sm:$0xff]
    %v593 = vld [vmem:[#allocation10 + $0x140] sm:$0xff]
    %v594 = vld [vmem:[#allocation10 + $0x148] sm:$0xff]
    %v595 = vld [vmem:[#allocation10 + $0x150] sm:$0xff]
    %v596 = vld [vmem:[#allocation10 + $0x158] sm:$0xff]
    %v597 = vld [vmem:[#allocation10 + $0x160] sm:$0xff]
    %v598 = vld [vmem:[#allocation10 + $0x168] sm:$0xff]
    %v599 = vld [vmem:[#allocation10 + $0x170] sm:$0xff]
    %v600 = vld [vmem:[#allocation10 + $0x178] sm:$0xff]
    %v601 = vld [vmem:[#allocation10 + $0x180] sm:$0xff]
    %v602 = vld [vmem:[#allocation10 + $0x188] sm:$0xff]
    %v603 = vld [vmem:[#allocation10 + $0x190] sm:$0xff]
    %v604 = vld [vmem:[#allocation10 + $0x198] sm:$0xff]
    %v605 = vld [vmem:[#allocation10 + $0x1a0] sm:$0xff]
    %v606 = vld [vmem:[#allocation10 + $0x1a8] sm:$0xff]
    %v607 = vld [vmem:[#allocation10 + $0x1b0] sm:$0xff]
    %v608 = vld [vmem:[#allocation10 + $0x1b8] sm:$0xff]
    %v609 = vld [vmem:[#allocation10 + $0x1c0] sm:$0xff]
    %v610 = vld [vmem:[#allocation10 + $0x1c8] sm:$0xff]
    %v611 = vld [vmem:[#allocation10 + $0x1d0] sm:$0xff]
    %v612 = vld [vmem:[#allocation10 + $0x1d8] sm:$0xff]
    %v613 = vld [vmem:[#allocation10 + $0x1e0] sm:$0xff]
    %v614 = vld [vmem:[#allocation10 + $0x1e8] sm:$0xff]
    %v615 = vld [vmem:[#allocation10 + $0x1f0] sm:$0xff]
    %v616 = vld [vmem:[#allocation10 + $0x1f8] sm:$0xff]
    %v621 = vsel %vm164, %v487, %v485
    %v622 = vsel %vm164, %v488, %v486
    %625 = vmatprep.subr.mxu0 %v554
    %626 = vmatpush1.msra.mxu0 %v553
    %627 = vmatprep.subr.mxu0 %v556
    %628 = vmatpush1.msra.mxu0 %v555
    %629 = vmatprep.subr.mxu0 %v558
    %630 = vmatpush1.msra.mxu0 %v557
    %631 = vmatprep.subr.mxu0 %v560
    %632 = vmatpush1.msra.mxu0 %v559
    %633 = vmatprep.subr.mxu0 %v562
    %634 = vmatpush1.msra.mxu0 %v561
    %635 = vmatprep.subr.mxu0 %v564
    %636 = vmatpush1.msra.mxu0 %v563
    %637 = vmatprep.subr.mxu0 %v566
    %638 = vmatpush1.msra.mxu0 %v565
    %639 = vmatprep.subr.mxu0 %v568
    %640 = vmatpush1.msra.mxu0 %v567
    %641 = vmatprep.subr.mxu0 %v570
    %642 = vmatpush1.msra.mxu0 %v569
    %643 = vmatprep.subr.mxu0 %v572
    %644 = vmatpush1.msra.mxu0 %v571
    %645 = vmatprep.subr.mxu0 %v574
    %646 = vmatpush1.msra.mxu0 %v573
    %647 = vmatprep.subr.mxu0 %v576
    %648 = vmatpush1.msra.mxu0 %v575
    %649 = vmatprep.subr.mxu0 %v578
    %650 = vmatpush1.msra.mxu0 %v577
    %651 = vmatprep.subr.mxu0 %v580
    %652 = vmatpush1.msra.mxu0 %v579
    %653 = vmatprep.subr.mxu0 %v582
    %654 = vmatpush1.msra.mxu0 %v581
    %655 = vmatprep.subr.mxu0 %v584
    %656 = vmatpush1.msra.mxu0 %v583
    %657 = vmatprep.subr.mxu0 %v586
    %658 = vmatpush1.msra.mxu0 %v585
    %659 = vmatprep.subr.mxu0 %v588
    %660 = vmatpush1.msra.mxu0 %v587
    %661 = vmatprep.subr.mxu0 %v590
    %662 = vmatpush1.msra.mxu0 %v589
    %663 = vmatprep.subr.mxu0 %v592
    %664 = vmatpush1.msra.mxu0 %v591
    %665 = vmatprep.subr.mxu0 %v594
    %666 = vmatpush1.msra.mxu0 %v593
    %667 = vmatprep.subr.mxu0 %v596
    %668 = vmatpush1.msra.mxu0 %v595
    %669 = vmatprep.subr.mxu0 %v598
    %670 = vmatpush1.msra.mxu0 %v597
    %671 = vmatprep.subr.mxu0 %v600
    %672 = vmatpush1.msra.mxu0 %v599
    %673 = vmatprep.subr.mxu0 %v602
    %674 = vmatpush1.msra.mxu0 %v601
    %675 = vmatprep.subr.mxu0 %v604
    %676 = vmatpush1.msra.mxu0 %v603
    %677 = vmatprep.subr.mxu0 %v606
    %678 = vmatpush1.msra.mxu0 %v605
    %679 = vmatprep.subr.mxu0 %v608
    %680 = vmatpush1.msra.mxu0 %v607
    %681 = vmatprep.subr.mxu0 %v610
    %682 = vmatpush1.msra.mxu0 %v609
    %683 = vmatprep.subr.mxu0 %v612
    %684 = vmatpush1.msra.mxu0 %v611
    %685 = vmatprep.subr.mxu0 %v614
    %686 = vmatpush1.msra.mxu0 %v613
    %687 = vmatprep.subr.mxu0 %v616
    %688 = vmatpush1.msra.mxu0 %v615
    %689 = vmatprep.mubr.f32.mxu0 %v622
    %690 = vmatmul.mubr.f32.gmra.mrb[0].mxu0 %v621
    %v691 = vpop.f32.mrb[0].mxu0
    %v692 = vadd.f32 0.0, %v691
    %v693 = vpop.f32.mrb[0].mxu0
    %v694 = vadd.f32 0.0, %v693
    %695 = vdwg.mxu0
    %v700 = vsel %vm164, %v453, %v441
    %v701 = vsel %vm164, %v459, %v447
    %704 = vmatprep.subr.mxu0 %v490
    %705 = vmatpush1.msra.mxu0 %v489
    %706 = vmatprep.subr.mxu0 %v492
    %707 = vmatpush1.msra.mxu0 %v491
    %708 = vmatprep.subr.mxu0 %v494
    %709 = vmatpush1.msra.mxu0 %v493
    %710 = vmatprep.subr.mxu0 %v496
    %711 = vmatpush1.msra.mxu0 %v495
    %712 = vmatprep.subr.mxu0 %v498
    %713 = vmatpush1.msra.mxu0 %v497
    %714 = vmatprep.subr.mxu0 %v500
    %715 = vmatpush1.msra.mxu0 %v499
    %716 = vmatprep.subr.mxu0 %v502
    %717 = vmatpush1.msra.mxu0 %v501
    %718 = vmatprep.subr.mxu0 %v504
    %719 = vmatpush1.msra.mxu0 %v503
    %720 = vmatprep.subr.mxu0 %v506
    %721 = vmatpush1.msra.mxu0 %v505
    %722 = vmatprep.subr.mxu0 %v508
    %723 = vmatpush1.msra.mxu0 %v507
    %724 = vmatprep.subr.mxu0 %v510
    %725 = vmatpush1.msra.mxu0 %v509
    %726 = vmatprep.subr.mxu0 %v512
    %727 = vmatpush1.msra.mxu0 %v511
    %728 = vmatprep.subr.mxu0 %v514
    %729 = vmatpush1.msra.mxu0 %v513
    %730 = vmatprep.subr.mxu0 %v516
    %731 = vmatpush1.msra.mxu0 %v515
    %732 = vmatprep.subr.mxu0 %v518
    %733 = vmatpush1.msra.mxu0 %v517
    %734 = vmatprep.subr.mxu0 %v520
    %735 = vmatpush1.msra.mxu0 %v519
    %736 = vmatprep.subr.mxu0 %v522
    %737 = vmatpush1.msra.mxu0 %v521
    %738 = vmatprep.subr.mxu0 %v524
    %739 = vmatpush1.msra.mxu0 %v523
    %740 = vmatprep.subr.mxu0 %v526
    %741 = vmatpush1.msra.mxu0 %v525
    %742 = vmatprep.subr.mxu0 %v528
    %743 = vmatpush1.msra.mxu0 %v527
    %744 = vmatprep.subr.mxu0 %v530
    %745 = vmatpush1.msra.mxu0 %v529
    %746 = vmatprep.subr.mxu0 %v532
    %747 = vmatpush1.msra.mxu0 %v531
    %748 = vmatprep.subr.mxu0 %v534
    %749 = vmatpush1.msra.mxu0 %v533
    %750 = vmatprep.subr.mxu0 %v536
    %751 = vmatpush1.msra.mxu0 %v535
    %752 = vmatprep.subr.mxu0 %v538
    %753 = vmatpush1.msra.mxu0 %v537
    %754 = vmatprep.subr.mxu0 %v540
    %755 = vmatpush1.msra.mxu0 %v539
    %756 = vmatprep.subr.mxu0 %v542
    %757 = vmatpush1.msra.mxu0 %v541
    %758 = vmatprep.subr.mxu0 %v544
    %759 = vmatpush1.msra.mxu0 %v543
    %760 = vmatprep.subr.mxu0 %v546
    %761 = vmatpush1.msra.mxu0 %v545
    %762 = vmatprep.subr.mxu0 %v548
    %763 = vmatpush1.msra.mxu0 %v547
    %764 = vmatprep.subr.mxu0 %v550
    %765 = vmatpush1.msra.mxu0 %v549
    %766 = vmatprep.subr.mxu0 %v552
    %767 = vmatpush1.msra.mxu0 %v551
    %768 = vmatprep.mubr.f32.mxu0 %v701
    %769 = vmatmul.mubr.f32.gmra.mrb[0].mxu0 %v700
    %v770 = vpop.f32.mrb[0].mxu0
    %v771 = vadd.f32 %v692, %v770
    %v772 = vpop.f32.mrb[0].mxu0
    %v773 = vadd.f32 %v694, %v772
    %774 = vdwg.mxu0
    %s775 = sld [smem:[#allocation12]]
    %v776 = vstv %s775
    %v777 = vmul.f32 %v771, %v776
    %v778 = vmul.f32 %v773, %v776
    %s779 = sld [smem:[#allocation12 + $0x1]]
    %v780 = vstv %s779
    %v781 = vadd.f32 %v777, %v780
    %v782 = vadd.f32 %v778, %v780
    %v783 = vxor.u32 %v781, 2147483648
    %v784 = vxor.u32 %v782, 2147483648
    %v785 = vmul.f32 %v783, 1.442695
    %v786 = vpow.pop %v785
    %v787 = vmul.f32 %v784, 1.442695
    %v788 = vpow.pop %v787
    %v789 = vadd.f32 %v786, 1.0
    %v790 = vadd.f32 %v788, 1.0
    %v791 = vrcp.pop %v789
    %v792 = vmul.f32 1.0, %v791
    %v793 = vrcp.pop %v790
    %v794 = vmul.f32 1.0, %v793
    %v797 = vcombine.low %v792, %v794
    %v799 = vunpack.c.l.s4 1966171168
    %v800 = vunpack.c.0.s8 %v799
    %v801 = vlaneseq
    %v802 = vshrl.u32 %v801, 7
    %v803 = vsub.s32 %v800, %v802
    %v804 = vrot.slane %v797, %v803
    %v805 = vcombine.high %v804, %v804
    %v807 = vunpack.c.l.s4 1966171168
    %v808 = vunpack.c.0.s8 %v807
    %v809 = vlaneseq
    %v810 = vshrl.u32 %v809, 7
    %v811 = vsub.s32 %v808, %v810
    %v812 = vrot.slane %v804, %v811
    %v814 = vunpack.c.l.s4 1966171168
    %v815 = vunpack.c.0.s8 %v814
    %v816 = vlaneseq
    %v817 = vshrl.u32 %v816, 7
    %v818 = vsub.s32 %v815, %v817
    %v819 = vrot.slane %v805, %v818
    %v820 = vlaneseq
    %v821 = vshrl.u32 %v820, 7
    %v822 = vsub.s32 0, %v821
    %v823 = vrot.slane %v812, %v822
    %v824 = vlaneseq
    %v825 = vshrl.u32 %v824, 7
    %v826 = vsub.s32 1, %v825
    %v827 = vrot.slane %v812, %v826
    %v828 = vlaneseq
    %v829 = vshrl.u32 %v828, 7
    %v830 = vsub.s32 0, %v829
    %v831 = vrot.slane %v819, %v830
    %v832 = vlaneseq
    %v833 = vshrl.u32 %v832, 7
    %v834 = vsub.s32 1, %v833
    %v835 = vrot.slane %v819, %v834
    %v840 = vmul.f32 %v432, %v823
    %v841 = vmul.f32 %v433, %v827
    %v842 = vmul.f32 %v434, %v831
    %v843 = vmul.f32 %v435, %v835
    %844 = vst [vmem:[#allocation13] sm:$0xff] %v840
    %845 = vst [vmem:[#allocation13 + $0x8] sm:$0xff] %v841
    %846 = vst [vmem:[#allocation13 + $0x10] sm:$0xff] %v842
    %847 = vst [vmem:[#allocation13 + $0x18] sm:$0xff] %v843
    // Predicated region
    $region50: #{tpu_custom_call.1} parent=1 // pred_check
      _
    $region51: #{tpu_custom_call.1} parent=1 // pred_check_branch
      %849 = sbr.rel (0) target = $region53
    $region52: #{tpu_custom_call.1} parent=1 // pred_region
      %s851 = ssub.s32 512, 512
      %852 = vsyncadd [#allocation5], %s851
      %s853 = sshll.u32 [#allocation13], 4
      %s854 = int_to_ptr.vmem [resolvable:$true] %s853
      %859 = dma.vmem_to_hbm [thread:$0]  %s854, 512, %s7, [#allocation5], 256, 256, 16
    $region53: #{tpu_custom_call.1} parent=1 // pred_fallthru
      _
    // Predicated region
    $region54: #{tpu_custom_call.1} parent=1 // pred_check
      _
    $region55: #{tpu_custom_call.1} parent=1 // pred_check_branch
      %861 = sbr.rel (0) target = $region57
    $region56: #{tpu_custom_call.1} parent=1 // pred_region
      %862 = dma.done [#allocation5], 512
    $region57: #{tpu_custom_call.1} parent=1 // pred_fallthru
      _
    %863 = vsyncpa [#allocation4], 1
    %864 = vsyncpa [#allocation8], 1
    %865 = vsyncpa [#allocation11], 1
    %866 = vsyncpa [#allocation5], 1
    %867 = vsyncpa [#allocation6], 1

</llo_original>
